<compile_context>
chip_gen: v5e
topology: v5e:2x2
jax: 0.10.0
libtpu: 0.0.40
codegen_flags: <defaults>
</compile_context>

<pallas_src>
import jax
import jax.numpy as jnp
from jax.experimental import pallas as pl
from jax.experimental.pallas import tpu as pltpu


def _hbm_copy_kernel(x_ref, o_ref, sem):
    # Single whole-array HBM->HBM DMA: one descriptor, no VMEM staging, no
    # grid, no tiling — works for any shape/dtype and any size on all gens.
    cp = pltpu.make_async_copy(x_ref, o_ref, sem)
    cp.start()
    cp.wait()


def _pallas_materialize_copy(x: jax.Array) -> jax.Array:
    """Materialize a copy of `x` via one HBM->HBM DMA inside a Pallas kernel."""
    return pl.pallas_call(
        _hbm_copy_kernel,
        out_shape=jax.ShapeDtypeStruct(x.shape, x.dtype),
        in_specs=[pl.BlockSpec(memory_space=pl.ANY)],
        out_specs=pl.BlockSpec(memory_space=pl.ANY),
        scratch_shapes=[pltpu.SemaphoreType.DMA(())],
    )(x)


def squeeze_final_output(x: jax.Array, *, use_kernel: bool = False) -> jax.Array:
    """Pallas equivalent of braindecode's SqueezeFinalOutput.forward.

    x: (b, c, t, 1) -> (b, c, t); if t == 1 -> (b, c).

    use_kernel=False (default): metadata-only reshape — zero HBM traffic.
    use_kernel=True: materializes the squeezed result via a single HBM->HBM
    DMA issued from a Pallas kernel (for cases where a real copy is required).
    """
    assert x.ndim == 4 and x.shape[-1] == 1, "expected input of shape (b, c, t, 1)"
    b, c, t, _ = x.shape

    # Static-shape squeeze decision, exactly like the PyTorch module.
    out_shape = (b, c) if t == 1 else (b, c, t)

    # Dropping trailing size-1 dims is a contiguous reshape: free / metadata-only.
    squeezed = x.reshape(out_shape)
    if not use_kernel:
        return squeezed

    return _pallas_materialize_copy(squeezed)


if __name__ == "__main__":
    key = jax.random.PRNGKey(0)

    # Case 1: (b, c, t, 1) -> (b, c, t), kernel path.
    x = jax.random.normal(key, (2, 4, 16, 1), dtype=jnp.float32)
    y = squeeze_final_output(x, use_kernel=True)
    jax.block_until_ready(y)
    ref = jnp.squeeze(x, axis=-1)
    assert y.shape == (2, 4, 16), y.shape
    assert jnp.allclose(y, ref), "mismatch vs reference squeeze"

    # Case 2: (b, c, 1, 1) -> (b, c) (time dim also removed), kernel path.
    x2 = jax.random.normal(jax.random.PRNGKey(1), (2, 4, 1, 1), dtype=jnp.float32)
    y2 = squeeze_final_output(x2, use_kernel=True)
    jax.block_until_ready(y2)
    ref2 = jnp.squeeze(x2, axis=(-1, -2))
    assert y2.shape == (2, 4), y2.shape
    assert jnp.allclose(y2, ref2), "mismatch vs reference squeeze (t==1)"

    # Default (metadata-only) path agrees too.
    y3 = squeeze_final_output(x)
    jax.block_until_ready(y3)
    assert y3.shape == (2, 4, 16) and jnp.allclose(y3, ref)

    print("KERNEL_OK")
</pallas_src>

<mosaic_0001>
module attributes {stable_mosaic.version = 11 : i64} {
  func.func @_hbm_copy_kernel(%arg0: memref<2x4x16xf32, #tpu.memory_space<any>>, %arg1: memref<2x4x16xf32, #tpu.memory_space<any>>, %arg2: memref<!tpu.dma_semaphore, #tpu.memory_space<semaphore_mem>>) attributes {dimension_semantics = [], scalar_prefetch = 0 : i64, scratch_operands = 1 : i64, tpu.core_type = #tpu.core_type<tc>} {
    tpu.enqueue_dma source(%arg0 : memref<2x4x16xf32, #tpu.memory_space<any>>) target(%arg1 : memref<2x4x16xf32, #tpu.memory_space<any>>) target_semaphore(%arg2 : memref<!tpu.dma_semaphore, #tpu.memory_space<semaphore_mem>>)
    tpu.wait_dma2 semaphore(%arg2 : memref<!tpu.dma_semaphore, #tpu.memory_space<semaphore_mem>>) src(%arg0 : memref<2x4x16xf32, #tpu.memory_space<any>>) dst(%arg1 : memref<2x4x16xf32, #tpu.memory_space<any>>)
    return
  }
}

</mosaic_0001>

<llo_original>
// kernel: tpu_custom_call.1
$region0: #{tpu_custom_call.1}
  #allocation0 [shape = 'u32[]', space=smem, size = 0x4, offset = 0x4, fixed_abs, tag = 'smem constant byte address 0x4 - core index']
  #allocation1 [shape = 'u32[72,128]{1,0:T(1,128)}', space=vmem, size = 0x9000, scoped, tag = 'internal scratch']
  #allocation2 [shape = 's32[1]{0}', space=sflag, size = 0x4, scoped, tag = 'scratch operand']
  #allocation3 [shape = 's32[]', space=sflag, size = 0x4, offset = 0, fixed_abs, tag = 'sflag constant byte address 0x0 - dummy sync flag']
  #allocation4 [shape = 'u32[0]{0}', space=smem, size = 0, offset = 0, fixed_abs, tag = 'smem constant byte address 0x0 - null']
  %s0 = inlined_call_operand.hbm [shape: f32[2,4,16], index: 0, kind: input, shape index: {}]
  %s1 = inlined_call_operand.hbm [shape: f32[2,4,16], index: 1, kind: output, shape index: {}]
  %s2 = sld [smem:[#allocation0]]
  $region2: #{tpu_custom_call.1} parent=0
    _
  %s4 = ssub.s32 1, %s2
  %s5 = scalar_select 0, %s4, %s2
  %s7 = sshll.u32 1, 14
  %s8 = sxor.u32 4294967295, %s7
  %s10 = sshll.u32 %s0, 4
  %s11 = int_to_ptr.hbm [resolvable:$true] %s10
  %s12 = sshll.u32 %s1, 4
  %s13 = int_to_ptr.hbm [resolvable:$true] %s12
  %16 = dma.general %s11, 128, %s13, [#allocation2], [#allocation3], [#allocation4], 0, 0
  %s17 = smul.u32 2, 4
  %s18 = smul.u32 %s17, 1
  %s19 = sshll.u32 %s18, 4
  %20 = dma.done [#allocation2], %s19
  %21 = vsyncmov [#allocation2]
  %s22 = vpop.sfrf %21
  %p23 = scmp.eq.s32.totalorder %s22, 0
  %p24 = pneg %p23
  %26 = shalt.err (%p24)

</llo_original>
